<compile_context>
chip_gen: v6e
topology: v6e:2x2x1
jax: 0.10.0
libtpu: 0.0.40
codegen_flags: <defaults>
</compile_context>

<pallas_src>
import functools

import jax
import jax.numpy as jnp
from jax.experimental import pallas as pl
from jax.experimental.pallas import tpu as pltpu

LANE = 128
SUBLANE = 8
_MAX_R_TILE = 8192        # rows of 128 lanes per block (4 MiB at f32)
_MIN_SPLIT_ROWS = 256     # only split a single tile in two if halves >= this
_PALLAS_MIN_ELEMS = 1024  # below this, plain jnp beats kernel-launch overhead


def _round_up(a, b):
    return -(-a // b) * b


def _cdiv(a, b):
    return -(-a // b)


def _vmem_capacity_bytes():
    try:
        return int(pltpu.get_tpu_info().vmem_capacity_bytes)
    except Exception:
        return 64 << 20   # conservative default: v7x per-TensorCore VMEM


def _largest_mult8_divisor(r, max_rows):
    hi = min(max_rows, r)
    hi -= hi % SUBLANE
    for cand in range(hi, SUBLANE - 1, -SUBLANE):
        if r % cand == 0:
            return cand
    return 0


def _plan_tiling(m, max_rows):
    """Pick (R_pad, r_tile) for the [T, R_pad, 128] slab.

    Prefers tilings that need NO padding (the (T, M) -> (T, R, 128) reshape is
    then a free bitcast); pads only for ragged M or when un-padded tiles would
    be tiny.  r_tile is a multiple of 8 or equal to R_pad (full-extent block),
    so the (8, 128) block constraint is always satisfied.
    """
    r = _cdiv(m, LANE)
    if m % LANE == 0:
        if r <= max_rows:
            if r % 16 == 0 and r // 2 >= _MIN_SPLIT_ROWS:
                return r, r // 2          # 2 tiles -> both v7x TensorCores busy
            return r, r                   # single full-extent tile, no padding
        d = _largest_mult8_divisor(r, max_rows)
        if d >= max(SUBLANE, max_rows // 4):
            return r, d                   # big blocks and still no padding
    # Padding path: ragged M, or no reasonable divisor of R.
    r8 = _round_up(r, SUBLANE)
    r_tile = min(max_rows, r8)
    if r_tile == r8 and r_tile % 16 == 0 and r_tile // 2 >= _MIN_SPLIT_ROWS:
        r_tile //= 2
    return _round_up(r, r_tile), r_tile


# ---------------------------------------------------------------------------
# Kernels: one (r_tile x 128) row slab, stepping through time on grid axis 1.
# ---------------------------------------------------------------------------
def _if_kernel_zero_init(x_ref, spike_ref, vout_ref, v_acc,
                         *, v_threshold, v_reset):
    t = pl.program_id(1)

    @pl.when(t == 0)
    def _():
        v_acc[...] = jnp.zeros_like(v_acc)        # v starts at 0 (no HBM read)

    # neuronal_charge (IF): v = v + x, accumulated in f32.
    v = v_acc[...] + x_ref[...].astype(jnp.float32)
    fired = v >= v_threshold
    spike_ref[...] = fired.astype(spike_ref.dtype)
    if v_reset is None:                            # soft reset
        v = jnp.where(fired, v - v_threshold, v)
    else:                                          # hard reset
        v = jnp.where(fired, v_reset, v)
    v_acc[...] = v

    @pl.when(t == pl.num_programs(1) - 1)
    def _():
        vout_ref[...] = v.astype(vout_ref.dtype)


def _if_kernel_with_vinit(x_ref, vinit_ref, spike_ref, vout_ref, v_acc,
                          *, v_threshold, v_reset):
    t = pl.program_id(1)

    @pl.when(t == 0)
    def _():
        v_acc[...] = vinit_ref[...].astype(jnp.float32)

    v = v_acc[...] + x_ref[...].astype(jnp.float32)
    fired = v >= v_threshold
    spike_ref[...] = fired.astype(spike_ref.dtype)
    if v_reset is None:
        v = jnp.where(fired, v - v_threshold, v)
    else:
        v = jnp.where(fired, v_reset, v)
    v_acc[...] = v

    @pl.when(t == pl.num_programs(1) - 1)
    def _():
        vout_ref[...] = v.astype(vout_ref.dtype)


# ---------------------------------------------------------------------------
# Drivers
# ---------------------------------------------------------------------------
def _jnp_if_sequence(x_tm, v_init_m, v_threshold, v_reset):
    """Plain-jnp path for tiny problems (kernel-launch overhead dominates)."""
    dtype = x_tm.dtype
    v0 = (jnp.zeros((x_tm.shape[1],), jnp.float32) if v_init_m is None
          else v_init_m.astype(jnp.float32))

    def step(v, x):
        v = v + x.astype(jnp.float32)
        fired = v >= v_threshold
        if v_reset is None:
            v_next = jnp.where(fired, v - v_threshold, v)
        else:
            v_next = jnp.where(fired, v_reset, v)
        return v_next, fired.astype(dtype)

    v_final, spikes = jax.lax.scan(step, v0, x_tm)
    return spikes, v_final.astype(dtype)


def _run_if_sequence(x_tm, v_init_m, v_threshold, v_reset):
    """x_tm: (T, M); v_init_m: (M,) or None. Returns ((T, M) spikes, (M,) v)."""
    T, M = x_tm.shape
    dtype = x_tm.dtype

    if T * M < _PALLAS_MIN_ELEMS:
        return _jnp_if_sequence(x_tm, v_init_m, v_threshold, v_reset)

    has_v_init = v_init_m is not None
    itemsize = jnp.dtype(dtype).itemsize

    # ---- VMEM budget / tile size (generation-aware: v7x has only 64 MiB) ---
    cap = _vmem_capacity_bytes()
    vmem_limit = int(min(48 << 20, max(32 << 20, cap // 2)))
    budget = vmem_limit - (6 << 20)   # headroom for compiler-internal scratch
    # resident blocks: x(2) + spikes(2) + v_out(2) [+ v_init(2)] + f32 scratch(1)
    bytes_per_row = LANE * ((6 + (2 if has_v_init else 0)) * itemsize + 4)
    max_rows = min(_MAX_R_TILE, budget // bytes_per_row)
    max_rows = max(SUBLANE, (max_rows // SUBLANE) * SUBLANE)

    R_pad, r_tile = _plan_tiling(M, max_rows)
    M_pad = R_pad * LANE
    padded = (M_pad != M)

    if padded:
        x_slab = jnp.pad(x_tm, ((0, 0), (0, M_pad - M))).reshape(T, R_pad, LANE)
    else:
        x_slab = x_tm.reshape(T, R_pad, LANE)      # free bitcast, no HBM copy

    blk = (1, r_tile, LANE)
    x_spec = pl.BlockSpec(blk, lambda i, t: (t, i, 0))
    carry_spec = pl.BlockSpec(blk, lambda i, t: (0, i, 0))

    n_elem = T * M_pad
    cost = pl.CostEstimate(
        flops=5 * n_elem,
        transcendentals=0,
        bytes_accessed=(2 * n_elem + (2 if has_v_init else 1) * M_pad) * itemsize,
    )

    if has_v_init:
        v_init_m = v_init_m.astype(dtype)
        if padded:
            v_slab = jnp.pad(v_init_m, (0, M_pad - M)).reshape(1, R_pad, LANE)
        else:
            v_slab = v_init_m.reshape(1, R_pad, LANE)
        kernel = functools.partial(_if_kernel_with_vinit,
                                   v_threshold=v_threshold, v_reset=v_reset)
        in_specs = [x_spec, carry_spec]
        args = (x_slab, v_slab)
    else:
        kernel = functools.partial(_if_kernel_zero_init,
                                   v_threshold=v_threshold, v_reset=v_reset)
        in_specs = [x_spec]
        args = (x_slab,)

    spike_slab, v_out_slab = pl.pallas_call(
        kernel,
        out_shape=(jax.ShapeDtypeStruct((T, R_pad, LANE), dtype),
                   jax.ShapeDtypeStruct((1, R_pad, LANE), dtype)),
        grid_spec=pltpu.PrefetchScalarGridSpec(
            num_scalar_prefetch=0,
            grid=(R_pad // r_tile, T),
            in_specs=in_specs,
            out_specs=(pl.BlockSpec(blk, lambda i, t: (t, i, 0)),   # spikes
                       carry_spec),                                 # final v
            scratch_shapes=[pltpu.VMEM((1, r_tile, LANE), jnp.float32)],
        ),
        compiler_params=pltpu.CompilerParams(
            dimension_semantics=("parallel", "arbitrary"),
            vmem_limit_bytes=vmem_limit),
        cost_estimate=cost,
    )(*args)

    if padded:
        spikes = spike_slab.reshape(T, M_pad)[:, :M]
        v_out = v_out_slab.reshape(M_pad)[:M]
    else:
        spikes = spike_slab.reshape(T, M)           # free bitcast
        v_out = v_out_slab.reshape(M)
    return spikes, v_out


# ---------------------------------------------------------------------------
# Module
# ---------------------------------------------------------------------------
class BaseNode:
    """JAX/Pallas port of spikingjelly lynxi_exchange.BaseNode (IF charge)."""

    def __init__(self, v_threshold: float = 1.0, v_reset: float = 0.0,
                 step_mode: str = 's', T: int = None, return_v: bool = False):
        self.v_threshold = float(v_threshold)
        self.v_reset = None if v_reset is None else float(v_reset)
        self.step_mode = step_mode
        self.T = T
        self.return_v = return_v

    # ---- single step -----------------------------------------------------
    def single_step_forward(self, x, v=None):
        x_shape = x.shape
        x_flat = x.reshape(1, -1)
        v_flat = None if v is None else v.reshape(-1)
        spikes, v_out = _run_if_sequence(x_flat, v_flat,
                                         self.v_threshold, self.v_reset)
        return spikes[0].reshape(x_shape), v_out.reshape(x_shape)

    # ---- multi step ------------------------------------------------------
    def multi_step_forward(self, x_seq_tm, v_init_m=None):
        return _run_if_sequence(x_seq_tm, v_init_m,
                                self.v_threshold, self.v_reset)

    # ---- forward ---------------------------------------------------------
    def __call__(self, x, v=None):
        if self.step_mode == 's':
            spike, v_out = self.single_step_forward(x, v)
            if self.return_v:
                return spike, v_out
            return spike
        elif self.step_mode == 'm':
            x_shape = x.shape
            B = x_shape[0] // self.T
            x_tm = x.reshape(self.T, -1)              # (T, B*rest)
            v_m = None if v is None else v.reshape(-1)
            spike_seq, v_out = self.multi_step_forward(x_tm, v_m)
            spike_seq = spike_seq.reshape(x_shape)
            if self.return_v:
                v_out = v_out.reshape((B,) + tuple(x_shape[1:]))
                return spike_seq, v_out
            return spike_seq
        else:
            raise ValueError(f"bad step_mode {self.step_mode}")


# ---- pure-JAX reference (for correctness check) ---------------------------
def _ref_multi(x, T, v_th, v_reset):
    x_shape = x.shape
    B = x_shape[0] // T
    xr = x.reshape(T, -1)
    v = jnp.zeros_like(xr[0])
    spikes = []
    for t in range(T):
        v = v + xr[t]
        fired = v >= v_th
        spikes.append(fired.astype(x.dtype))
        if v_reset is None:
            v = jnp.where(fired, v - v_th, v)
        else:
            v = jnp.where(fired, v_reset, v)
    return (jnp.stack(spikes).reshape(x_shape),
            v.reshape((B,) + tuple(x_shape[1:])))


if __name__ == "__main__":
    key = jax.random.PRNGKey(0)
    k1, k2 = jax.random.split(key)

    # ---- multi-step mode ('m'): input [T*B, C, H, W] ----
    T, B, C, H, W = 4, 2, 4, 8, 8
    x_m = jax.random.uniform(k1, (T * B, C, H, W), dtype=jnp.float32) * 0.6
    node_m = BaseNode(v_threshold=1.0, v_reset=0.0, step_mode='m', T=T,
                      return_v=True)
    spike_seq, v_final = node_m(x_m)
    jax.block_until_ready((spike_seq, v_final))

    ref_spk, ref_v = _ref_multi(x_m, T, 1.0, 0.0)
    assert spike_seq.shape == x_m.shape
    assert v_final.shape == (B, C, H, W)
    assert jnp.allclose(spike_seq, ref_spk)
    assert jnp.allclose(v_final, ref_v, atol=1e-6)

    # ---- single-step mode ('s'): input [B, C, H, W] ----
    x_s = jax.random.normal(k2, (2, 4, 16, 16), dtype=jnp.float32)
    node_s = BaseNode(v_threshold=1.0, v_reset=0.0, step_mode='s',
                      return_v=True)
    spike_s, v_s = node_s(x_s)
    jax.block_until_ready((spike_s, v_s))
    ref_s = (x_s >= 1.0).astype(x_s.dtype)
    ref_vs = jnp.where(x_s >= 1.0, 0.0, x_s)
    assert jnp.allclose(spike_s, ref_s)
    assert jnp.allclose(v_s, ref_vs, atol=1e-6)

    print("KERNEL_OK")
</pallas_src>

<mosaic_0001>
module attributes {stable_mosaic.version = 11 : i64} {
  func.func @_if_kernel_zero_init(%arg0: i32, %arg1: i32, %arg2: memref<1x4x128xf32, #tpu.memory_space<vmem>>, %arg3: memref<1x4x128xf32, #tpu.memory_space<vmem>>, %arg4: memref<1x4x128xf32, #tpu.memory_space<vmem>>, %arg5: memref<1x4x128xf32, #tpu.memory_space<vmem>>) attributes {dimension_semantics = [#tpu.dimension_semantics<parallel>, #tpu.dimension_semantics<arbitrary>], iteration_bounds = array<i64: 1, 4>, scalar_prefetch = 0 : i64, scratch_operands = 1 : i64, tpu.core_type = #tpu.core_type<tc>, window_params = [{transform_indices = @transform_0, window_bounds = array<i64: 1, 4, 128>}, {transform_indices = @transform_1, window_bounds = array<i64: 1, 4, 128>}, {transform_indices = @transform_2, window_bounds = array<i64: 1, 4, 128>}]} {
    %c0_i32 = arith.constant 0 : i32
    %0 = arith.cmpi eq, %arg1, %c0_i32 : i32
    %1 = arith.extui %0 : i1 to i32
    %c0_i32_0 = arith.constant 0 : i32
    %2 = arith.cmpi ne, %1, %c0_i32_0 : i32
    scf.if %2 {
      %cst_14 = arith.constant 0.000000e+00 : f32
      %17 = vector.broadcast %cst_14 : f32 to vector<1x4x128xf32>
      %c0_15 = arith.constant 0 : index
      %c0_16 = arith.constant 0 : index
      %c0_17 = arith.constant 0 : index
      %18 = vector.load %arg5[%c0_15, %c0_16, %c0_17] : memref<1x4x128xf32, #tpu.memory_space<vmem>>, vector<1x4x128xf32>
      tpu.vector_store %arg5[%c0_15, %c0_16, %c0_17], %17 {strides = array<i32>} : memref<1x4x128xf32, #tpu.memory_space<vmem>>, vector<1x4x128xf32>,
    } else {
    }
    %c0 = arith.constant 0 : index
    %c0_1 = arith.constant 0 : index
    %c0_2 = arith.constant 0 : index
    %3 = vector.load %arg5[%c0, %c0_1, %c0_2] : memref<1x4x128xf32, #tpu.memory_space<vmem>>, vector<1x4x128xf32>
    %c0_3 = arith.constant 0 : index
    %c0_4 = arith.constant 0 : index
    %c0_5 = arith.constant 0 : index
    %4 = vector.load %arg2[%c0_3, %c0_4, %c0_5] : memref<1x4x128xf32, #tpu.memory_space<vmem>>, vector<1x4x128xf32>
    %5 = arith.addf %3, %4 : vector<1x4x128xf32>
    %cst = arith.constant 1.000000e+00 : f32
    %6 = vector.broadcast %cst : f32 to vector<1x4x128xf32>
    %7 = arith.cmpf oge, %5, %6 : vector<1x4x128xf32>
    %8 = arith.extui %7 : vector<1x4x128xi1> to vector<1x4x128xi32>
    %9 = arith.sitofp %8 : vector<1x4x128xi32> to vector<1x4x128xf32>
    %c0_6 = arith.constant 0 : index
    %c0_7 = arith.constant 0 : index
    %c0_8 = arith.constant 0 : index
    %10 = vector.load %arg3[%c0_6, %c0_7, %c0_8] : memref<1x4x128xf32, #tpu.memory_space<vmem>>, vector<1x4x128xf32>
    tpu.vector_store %arg3[%c0_6, %c0_7, %c0_8], %9 {strides = array<i32>} : memref<1x4x128xf32, #tpu.memory_space<vmem>>, vector<1x4x128xf32>,
    %cst_9 = arith.constant 0.000000e+00 : f32
    %11 = vector.broadcast %cst_9 : f32 to vector<1x4x128xf32>
    %12 = arith.select %7, %11, %5 : vector<1x4x128xi1>, vector<1x4x128xf32>
    %c0_10 = arith.constant 0 : index
    %c0_11 = arith.constant 0 : index
    %c0_12 = arith.constant 0 : index
    %13 = vector.load %arg5[%c0_10, %c0_11, %c0_12] : memref<1x4x128xf32, #tpu.memory_space<vmem>>, vector<1x4x128xf32>
    tpu.vector_store %arg5[%c0_10, %c0_11, %c0_12], %12 {strides = array<i32>} : memref<1x4x128xf32, #tpu.memory_space<vmem>>, vector<1x4x128xf32>,
    %c3_i32 = arith.constant 3 : i32
    %14 = arith.cmpi eq, %arg1, %c3_i32 : i32
    %15 = arith.extui %14 : i1 to i32
    %c0_i32_13 = arith.constant 0 : i32
    %16 = arith.cmpi ne, %15, %c0_i32_13 : i32
    scf.if %16 {
      %c0_14 = arith.constant 0 : index
      %c0_15 = arith.constant 0 : index
      %c0_16 = arith.constant 0 : index
      %17 = vector.load %arg4[%c0_14, %c0_15, %c0_16] : memref<1x4x128xf32, #tpu.memory_space<vmem>>, vector<1x4x128xf32>
      tpu.vector_store %arg4[%c0_14, %c0_15, %c0_16], %12 {strides = array<i32>} : memref<1x4x128xf32, #tpu.memory_space<vmem>>, vector<1x4x128xf32>,
    } else {
    }
    return
  }
  func.func @transform_0(%arg0: i32, %arg1: i32) -> (i32, i32, i32) {
    %c0_i32 = arith.constant 0 : i32
    %c0_i32_0 = arith.constant 0 : i32
    return %arg1, %arg0, %c0_i32 : i32, i32, i32
  }
  func.func @transform_1(%arg0: i32, %arg1: i32) -> (i32, i32, i32) {
    %c0_i32 = arith.constant 0 : i32
    %c0_i32_0 = arith.constant 0 : i32
    return %arg1, %arg0, %c0_i32 : i32, i32, i32
  }
  func.func @transform_2(%arg0: i32, %arg1: i32) -> (i32, i32, i32) {
    %c0_i32 = arith.constant 0 : i32
    %c0_i32_0 = arith.constant 0 : i32
    %c0_i32_1 = arith.constant 0 : i32
    return %c0_i32, %arg0, %c0_i32_0 : i32, i32, i32
  }
}

</mosaic_0001>

<llo_original>
// kernel: tpu_custom_call.1
$region0: #{tpu_custom_call.1}
  #allocation0 [shape = 'u32[]', space=smem, size = 0x4, offset = 0x4, fixed_abs, tag = 'smem constant byte address 0x4 - core index']
  #allocation1 [shape = 'u32[144,128]{1,0:T(1,128)}', space=vmem, size = 0x12000, scoped, tag = 'internal scratch']
  #allocation2 [shape = 'f32[1,4,128]{2,1,0:T(4,128)}', space=vmem, size = 0x800, scoped, tag = 'scratch operand']
  %s0 = inlined_call_operand.hbm [shape: f32[4,4,128], index: 0, kind: input, shape index: {}]
  %s1 = inlined_call_operand.hbm [shape: f32[4,4,128], index: 1, kind: output, shape index: {0}]
  %s2 = inlined_call_operand.hbm [shape: f32[1,4,128], index: 2, kind: output, shape index: {1}]
  %3 = xla_tuple %s1, %s2
  %s4 = sld [smem:[#allocation0]]
  $region57: #{tpu_custom_call.1} parent=0
    _
  %s6 = ssub.s32 1, %s4
  %s7 = scalar_select 0, %s6, %s4
  $region1: #{tpu_custom_call.1} parent=0
    #allocation3 [shape = 'u8[4096]{0}', space=vmem, size = 0x1000, scoped, tag = 'input window, operand 0']
    #allocation4 [shape = 's32[2]{0}', space=sflag, size = 0x8, scoped, tag = 'scoped memory for tpu_custom_call.1']
    #allocation5 [shape = 's32[2]{0}', space=sflag, size = 0x8, scoped, tag = 'scoped memory for tpu_custom_call.1']
    #allocation6 [shape = 'u8[4096]{0}', space=vmem, size = 0x1000, scoped, tag = 'output window, operand 0']
    #allocation7 [shape = 'u8[2048]{0}', space=vmem, size = 0x800, scoped, tag = 'output window, operand 1, single buffered']
    #allocation8 [shape = 's32[1]{0}', space=sflag, size = 0x4, scoped, tag = 'scoped memory for tpu_custom_call.1']
    %8 = vsyncpa [#allocation4], 0
    %s9 = scalar_lea.sflag [#allocation4], 1
    %10 = vsyncpa %s9, 0
    %11 = vsyncpa [#allocation5], 0
    %s12 = scalar_lea.sflag [#allocation5], 1
    %13 = vsyncpa %s12, 0
    %14 = vsyncpa [#allocation8], 0
    loop: start=0, step=1, limit=6
    $region2: #{tpu_custom_call.1} parent=1 // loop_pre_header
      _
    $region3: #{tpu_custom_call.1} parent=1 // loop_header
      %s16 = sphi 0, %s20
      %p17 = scmp.ge.s32.totalorder %s16, 6
      %s23 = sphi 0, %s35
      %s24 = sphi 0, %s31
      %s25 = sphi 0, %s23
      %s26 = sphi 0, %s24
      %s27 = sphi 0, %s25
      %s28 = sphi 0, %s26
      %s40 = sphi 0, %s42
      %s43 = sphi 0, %s40
      %s44 = sphi 0, %s43
      %s60 = sphi 0, %s44
      %s68 = sphi 0, %s70
      %s71 = sphi 0, %s68
      %s72 = sphi 0, %s71
      %s88 = sphi 0, %s72
      %s94 = sphi 0, %s96
      %s97 = sphi 0, %s94
      %s98 = sphi 0, %s97
      %s114 = sphi 0, %s98
    $region4: #{tpu_custom_call.1} parent=1 // loop_header_branch
      %19 = sbr.rel (%p17) target = $region8
    $region5: #{tpu_custom_call.1} parent=1 // loop_body
      %s21 = ssub.s32 %s16, 1
      %s22 = ssub.s32 %s16, 2
      %s29 = sadd.s32 1, %s24
      %p30 = scmp.ge.s32.totalorder %s29, 4
      %s31 = scalar_select %p30, 0, %s29
      %s32 = sadd.s32 1, %s23
      %s33 = scalar_select %p30, %s32, %s23
      %p34 = scmp.ge.s32.totalorder %s33, 1
      %s35 = scalar_select %p34, 0, %s33
      %s36 = ssub.s32 %s24, %s31
      %s37 = ssub.s32 %s23, %s35
      %s38 = sor.u32 %s36, %s37
      %p39 = scmp.eq.s32.totalorder %s38, 0
      %s41 = sadd.s32 %s40, 1
      %s42 = scalar_select %p39, %s40, %s41
      %p45 = pneg %p39
      %p46 = scmp.eq.s32.totalorder %s16, 3
      %p47 = por %p45, %p46
      %p48 = scmp.ne.s32.totalorder %s40, %s43
      %p49 = scmp.eq.s32.totalorder %s16, 0
      %p50 = por %p48, %p49
      %p51 = scmp.ne.s32.totalorder %s40, %s43
      %p52 = scmp.eq.s32.totalorder %s21, 3
      %p53 = por %p51, %p52
      %p54 = scmp.ne.s32.totalorder %s43, %s44
      %p55 = scmp.eq.s32.totalorder %s21, 0
      %p56 = por %p54, %p55
      %p57 = scmp.ne.s32.totalorder %s43, %s44
      %p58 = scmp.eq.s32.totalorder %s22, 3
      %p59 = por %p57, %p58
      %p61 = scmp.ne.s32.totalorder %s44, %s60
      %p62 = scmp.eq.s32.totalorder %s22, 0
      %p63 = por %p61, %p62
      %s64 = ssub.s32 %s24, %s31
      %s65 = ssub.s32 %s23, %s35
      %s66 = sor.u32 %s64, %s65
      %p67 = scmp.eq.s32.totalorder %s66, 0
      %s69 = sadd.s32 %s68, 1
      %s70 = scalar_select %p67, %s68, %s69
      %p73 = pneg %p67
      %p74 = scmp.eq.s32.totalorder %s16, 3
      %p75 = por %p73, %p74
      %p76 = scmp.ne.s32.totalorder %s68, %s71
      %p77 = scmp.eq.s32.totalorder %s16, 0
      %p78 = por %p76, %p77
      %p79 = scmp.ne.s32.totalorder %s68, %s71
      %p80 = scmp.eq.s32.totalorder %s21, 3
      %p81 = por %p79, %p80
      %p82 = scmp.ne.s32.totalorder %s71, %s72
      %p83 = scmp.eq.s32.totalorder %s21, 0
      %p84 = por %p82, %p83
      %p85 = scmp.ne.s32.totalorder %s71, %s72
      %p86 = scmp.eq.s32.totalorder %s22, 3
      %p87 = por %p85, %p86
      %p89 = scmp.ne.s32.totalorder %s72, %s88
      %p90 = scmp.eq.s32.totalorder %s22, 0
      %p91 = por %p89, %p90
      %s92 = ssub.s32 %s23, %s35
      %p93 = scmp.eq.s32.totalorder %s92, 0
      %s95 = sadd.s32 %s94, 1
      %s96 = scalar_select %p93, %s94, %s95
      %p99 = pneg %p93
      %p100 = scmp.eq.s32.totalorder %s16, 3
      %p101 = por %p99, %p100
      %p102 = scmp.ne.s32.totalorder %s94, %s97
      %p103 = scmp.eq.s32.totalorder %s16, 0
      %p104 = por %p102, %p103
      %p105 = scmp.ne.s32.totalorder %s94, %s97
      %p106 = scmp.eq.s32.totalorder %s21, 3
      %p107 = por %p105, %p106
      %p108 = scmp.ne.s32.totalorder %s97, %s98
      %p109 = scmp.eq.s32.totalorder %s21, 0
      %p110 = por %p108, %p109
      %p111 = scmp.ne.s32.totalorder %s97, %s98
      %p112 = scmp.eq.s32.totalorder %s22, 3
      %p113 = por %p111, %p112
      %p115 = scmp.ne.s32.totalorder %s98, %s114
      %p116 = scmp.eq.s32.totalorder %s22, 0
      %p117 = por %p115, %p116
      %p118 = scmp.le.s32.totalorder 1, %s16
      %p119 = scmp.lt.s32.totalorder %s16, 5
      %p120 = pnand %p118, %p119
      %p121 = pneg %p120
      // Predicated region
      $region9: #{tpu_custom_call.1} parent=5 // pred_check
        _
      $region10: #{tpu_custom_call.1} parent=5 // pred_check_branch
        %123 = sbr.rel (%p120) target = $region12
      $region11: #{tpu_custom_call.1} parent=5 // pred_region
        %s124 = ssub.s32 %s16, 1
      $region12: #{tpu_custom_call.1} parent=5 // pred_fallthru
        _
      %p125 = scmp.lt.s32.totalorder %s16, 4
      // Predicated region
      $region13: #{tpu_custom_call.1} parent=5 // pred_check
        %p126 = pneg %p125
      $region14: #{tpu_custom_call.1} parent=5 // pred_check_branch
        %128 = sbr.rel (%p126) target = $region16
      $region15: #{tpu_custom_call.1} parent=5 // pred_region
        // Predicated region
        $region17: #{tpu_custom_call.1} parent=15 // pred_check
          %p129 = pneg %p50
        $region18: #{tpu_custom_call.1} parent=15 // pred_check_branch
          %131 = sbr.rel (%p129) target = $region20
        $region19: #{tpu_custom_call.1} parent=15 // pred_region
          %s132 = sand.u32 %s40, 1
          %s133 = scalar_lea.sflag [#allocation4], %s132
          %s134 = sand.u32 %s40, 1
          %s135 = smul.addr %s134, 4
          %s136 = scalar_lea.vmem [#allocation3], %s135
          %s138 = ssub.s32 64, 64
          %139 = vsyncadd %s133, %s138
          %s140 = sadd.s32 %s23, %s24
          %s141 = smul.addr %s140, 64
          %s142 = scalar_lea.hbm %s0, %s141
          %s144 = sshll.u32 %s136, 4
          %s145 = int_to_ptr.vmem [resolvable:$true] %s144
          %147 = dma.hbm_to_vmem [thread:$0]  %s142, 64, %s145, %s133
        $region20: #{tpu_custom_call.1} parent=15 // pred_fallthru
          _
      $region16: #{tpu_custom_call.1} parent=5 // pred_fallthru
        _
      %p148 = scmp.le.s32.totalorder 1, %s16
      %p149 = scmp.lt.s32.totalorder %s16, 5
      %p150 = pnand %p148, %p149
      %p151 = pneg %p150
      // Predicated region
      $region21: #{tpu_custom_call.1} parent=5 // pred_check
        _
      $region22: #{tpu_custom_call.1} parent=5 // pred_check_branch
        %153 = sbr.rel (%p150) target = $region24
      $region23: #{tpu_custom_call.1} parent=5 // pred_region
        %s154 = ssub.s32 %s16, 1
        %s155 = sand.u32 %s43, 1
        %s156 = scalar_lea.sflag [#allocation4], %s155
        %s157 = sand.u32 %s43, 1
        %s158 = smul.addr %s157, 4
        %s159 = scalar_lea.vmem [#allocation3], %s158
        // Predicated region
        $region25: #{tpu_custom_call.1} parent=23 // pred_check
          %p160 = pneg %p56
        $region26: #{tpu_custom_call.1} parent=23 // pred_check_branch
          %162 = sbr.rel (%p160) target = $region28
        $region27: #{tpu_custom_call.1} parent=23 // pred_region
          %163 = dma.done %s156, 64
        $region28: #{tpu_custom_call.1} parent=23 // pred_fallthru
          _
        %s164 = sand.u32 %s43, 1
        %s165 = scalar_lea.sflag [#allocation4], %s164
        %s166 = sand.u32 %s43, 1
        %s167 = smul.addr %s166, 4
        %s168 = scalar_lea.vmem [#allocation3], %s167
        %p169 = pneg %p56
        %p170 = pneg %p53
        %p171 = pneg %p84
        %p172 = pneg %p81
        %s173 = sand.u32 %s71, 1
        %s174 = scalar_lea.sflag [#allocation5], %s173
        %s175 = sand.u32 %s71, 1
        %s176 = smul.addr %s175, 4
        %s177 = scalar_lea.vmem [#allocation6], %s176
        %p178 = pneg %p110
        %p179 = pneg %p107
        %p180 = scmp.eq.s32.totalorder %s26, 0
        // Predicated region
        $region29: #{tpu_custom_call.1} parent=23 // pred_check
          %p181 = pneg %p180
        $region30: #{tpu_custom_call.1} parent=23 // pred_check_branch
          %183 = sbr.rel (%p181) target = $region32
        $region31: #{tpu_custom_call.1} parent=23 // pred_region
          %184 = vst [vmem:[#allocation2] sm:$0xf] 0.0
        $region32: #{tpu_custom_call.1} parent=23 // pred_fallthru
          _
        %v185 = vld [vmem:[#allocation2] sm:$0xf]
        %v186 = vld [vmem:[%s159] sm:$0xf]
        %v187 = vadd.f32 %v185, %v186
        %vm188 = vcmp.ge.f32.partialorder %v187, 1.0
        %v189 = vsel %vm188, 1, 0
        %v190 = vcvt.s32.f32 %v189
        %191 = vst [vmem:[%s177] sm:$0xf] %v190
        %v192 = vsel %vm188, 0.0, %v187
        %193 = vst [vmem:[#allocation2] sm:$0xf] %v192
        %p194 = scmp.eq.s32.totalorder %s26, 3
        // Predicated region
        $region33: #{tpu_custom_call.1} parent=23 // pred_check
          %p195 = pneg %p194
        $region34: #{tpu_custom_call.1} parent=23 // pred_check_branch
          %197 = sbr.rel (%p195) target = $region36
        $region35: #{tpu_custom_call.1} parent=23 // pred_region
          %198 = vst [vmem:[#allocation7] sm:$0xf] %v192
        $region36: #{tpu_custom_call.1} parent=23 // pred_fallthru
          _
        %s199 = sand.u32 %s71, 1
        %s200 = scalar_lea.sflag [#allocation5], %s199
        %s201 = sand.u32 %s71, 1
        %s202 = smul.addr %s201, 4
        %s203 = scalar_lea.vmem [#allocation6], %s202
        // Predicated region
        $region37: #{tpu_custom_call.1} parent=23 // pred_check
          %p204 = pneg %p81
        $region38: #{tpu_custom_call.1} parent=23 // pred_check_branch
          %206 = sbr.rel (%p204) target = $region40
        $region39: #{tpu_custom_call.1} parent=23 // pred_region
          %s208 = ssub.s32 64, 64
          %209 = vsyncadd %s200, %s208
          %s210 = sadd.s32 %s25, %s26
          %s211 = smul.addr %s210, 64
          %s212 = scalar_lea.hbm %s1, %s211
          %s214 = sshll.u32 %s203, 4
          %s215 = int_to_ptr.vmem [resolvable:$true] %s214
          %217 = dma.vmem_to_hbm [thread:$0]  %s215, 64, %s212, %s200
        $region40: #{tpu_custom_call.1} parent=23 // pred_fallthru
          _
        // Predicated region
        $region41: #{tpu_custom_call.1} parent=23 // pred_check
          %p218 = pneg %p107
        $region42: #{tpu_custom_call.1} parent=23 // pred_check_branch
          %220 = sbr.rel (%p218) target = $region44
        $region43: #{tpu_custom_call.1} parent=23 // pred_region
          %s222 = ssub.s32 64, 64
          %223 = vsyncadd [#allocation8], %s222
          %s224 = smul.addr %s25, 64
          %s225 = scalar_lea.hbm %s2, %s224
          %s227 = sshll.u32 [#allocation7], 4
          %s228 = int_to_ptr.vmem [resolvable:$true] %s227
          %230 = dma.vmem_to_hbm [thread:$0]  %s228, 64, %s225, [#allocation8]
        $region44: #{tpu_custom_call.1} parent=23 // pred_fallthru
          _
        // Predicated region
        $region45: #{tpu_custom_call.1} parent=23 // pred_check
          %p231 = pneg %p107
        $region46: #{tpu_custom_call.1} parent=23 // pred_check_branch
          %233 = sbr.rel (%p231) target = $region48
        $region47: #{tpu_custom_call.1} parent=23 // pred_region
          %234 = dma.done [#allocation8], 64
        $region48: #{tpu_custom_call.1} parent=23 // pred_fallthru
          _
      $region24: #{tpu_custom_call.1} parent=5 // pred_fallthru
        _
      %p235 = scmp.le.s32.totalorder 2, %s16
      // Predicated region
      $region49: #{tpu_custom_call.1} parent=5 // pred_check
        %p236 = pneg %p235
      $region50: #{tpu_custom_call.1} parent=5 // pred_check_branch
        %238 = sbr.rel (%p236) target = $region52
      $region51: #{tpu_custom_call.1} parent=5 // pred_region
        %s239 = ssub.s32 %s16, 2
        // Predicated region
        $region53: #{tpu_custom_call.1} parent=51 // pred_check
          %p240 = pneg %p87
        $region54: #{tpu_custom_call.1} parent=51 // pred_check_branch
          %242 = sbr.rel (%p240) target = $region56
        $region55: #{tpu_custom_call.1} parent=51 // pred_region
          %s243 = sand.u32 %s72, 1
          %s244 = scalar_lea.sflag [#allocation5], %s243
          %s245 = sand.u32 %s72, 1
          %s246 = smul.addr %s245, 4
          %s247 = scalar_lea.vmem [#allocation6], %s246
          %248 = dma.done %s244, 64
        $region56: #{tpu_custom_call.1} parent=51 // pred_fallthru
          _
      $region52: #{tpu_custom_call.1} parent=5 // pred_fallthru
        _
    $region6: #{tpu_custom_call.1} parent=1 // loop_footer
      %s20 = sadd.s32 1, %s16
    $region7: #{tpu_custom_call.1} parent=1 // loop_footer_branch
      %15 = sbr.rel target = $region3
    $region8: #{tpu_custom_call.1} parent=1 // loop_exit
      _
    %249 = vsyncpa [#allocation4], 1
    %s250 = scalar_lea.sflag [#allocation4], 1
    %251 = vsyncpa %s250, 1
    %252 = vsyncpa [#allocation5], 1
    %s253 = scalar_lea.sflag [#allocation5], 1
    %254 = vsyncpa %s253, 1
    %255 = vsyncpa [#allocation8], 1

</llo_original>
